<compile_context>
chip_gen: v7x
topology: tpu7x:2x2x1
jax: 0.10.0
libtpu: 0.0.40
codegen_flags: <defaults>
</compile_context>

<pallas_src>
import jax
import jax.numpy as jnp
from jax.experimental import pallas as pl
from jax.experimental.pallas import tpu as pltpu


def _feature_prod(z):
    """Product over the sublane (feature) axis of z: (F, TB) -> (1, TB).

    For power-of-2 F, a log2(F) tree of XLU sublane rolls keeps every multiply
    on full-width vregs (no sub-vreg slices / relayouts).  Otherwise fall back
    to a plain sublane reduction.
    """
    f = z.shape[0]
    if f & (f - 1) == 0:                      # power of two (incl. f == 1)
        shift = f // 2
        while shift:
            z = z * pltpu.roll(z, shift=shift, axis=0)
            shift //= 2
        return z[:1, :]
    return jnp.prod(z, axis=0, keepdims=True)


def qnn_classifier_kernel(x_ref, theta_ref, wb_ref, o_ref):
    # x_ref:     VMEM (TB, F)  contiguous batch-major tile (HBM-native layout)
    # theta_ref: VMEM (F, 1)   qnn rotation angles, broadcast across lanes
    # wb_ref:    SMEM (2,)     packed Linear(1, 1) params: [weight, bias]
    # o_ref:     VMEM (1, TB)  lane-dense output tile
    xt = x_ref[...].T                              # (F, TB) via XLU (idle slot)
    z = jnp.cos(xt + theta_ref[...])               # per-qubit <Z> after RY(x+theta)
    q = _feature_prod(z)                           # (1, TB)  <Z^(x)n>
    y = q * wb_ref[0] + wb_ref[1]                  # Linear(1, 1)
    # sigmoid(y) == 0.5 + 0.5 * tanh(y / 2): single EUP transcendental.
    o_ref[...] = 0.5 + 0.5 * jnp.tanh(0.5 * y)


def quantum_classifier_forward(x, theta, wb, *, tb=32768):
    """x: (B, F) f32, theta: (F, 1) f32, wb: (2,) f32  ->  (B, 1) f32."""
    B, F = x.shape

    # Lane-multiple batch tile, clamped to the (rounded-up) batch: one big tile
    # for small B; ~1 MiB (double-buffered ~2 MiB) x tiles for large B, well
    # under every generation's scoped-VMEM default (incl. v7x's 32 MiB).
    tb = pl.cdiv(tb, 128) * 128
    tb = min(tb, pl.cdiv(B, 128) * 128)
    grid = (pl.cdiv(B, tb),)

    cost = pl.CostEstimate(
        flops=B * (2 * F + 4),                     # add + prod tree + linear + sigmoid
        transcendentals=B * (F + 1),               # cos per feature + tanh
        bytes_accessed=4 * (B * F + F + 2 + B),
    )

    out = pl.pallas_call(
        qnn_classifier_kernel,
        out_shape=jax.ShapeDtypeStruct((1, B), jnp.float32),
        grid=grid,
        in_specs=[
            pl.BlockSpec((tb, F), lambda i: (i, 0)),           # contiguous x tile
            pl.BlockSpec((F, 1), lambda i: (0, 0)),            # theta, resident
            pl.BlockSpec(memory_space=pltpu.MemorySpace.SMEM),  # packed [w, b]
        ],
        out_specs=pl.BlockSpec((1, tb), lambda i: (0, i)),     # lane-dense output
        compiler_params=pltpu.CompilerParams(
            dimension_semantics=("parallel",)),
        cost_estimate=cost,
    )(x, theta, wb)

    return out.reshape(B, 1)                                   # metadata-only reshape


def reference_forward(x, theta, wb):
    q = jnp.prod(jnp.cos(x + theta.reshape(1, -1)), axis=-1, keepdims=True)
    y = q * wb[0] + wb[1]
    return jax.nn.sigmoid(y)


if __name__ == "__main__":
    B, F = 500, 8   # batch (one ragged 512-wide tile), 8 feature/qubit angles

    key = jax.random.PRNGKey(0)
    kx, kt, kw, kb = jax.random.split(key, 4)

    x = jax.random.normal(kx, (B, F), dtype=jnp.float32)
    # qnn trainable rotation angles, kept (F, 1) for the lane-broadcast layout
    theta = jax.random.uniform(kt, (F, 1), dtype=jnp.float32,
                               minval=-jnp.pi, maxval=jnp.pi)
    # nn.Linear(1, 1): weight/bias ~ U(-1, 1) (fan_in = 1), packed into one
    # SMEM scalar buffer [weight, bias].
    w = jax.random.uniform(kw, (), dtype=jnp.float32, minval=-1.0, maxval=1.0)
    b = jax.random.uniform(kb, (), dtype=jnp.float32, minval=-1.0, maxval=1.0)
    wb = jnp.stack([w, b])                                     # (2,)

    out = quantum_classifier_forward(x, theta, wb)
    out = jax.block_until_ready(out)

    ref = reference_forward(x, theta, wb)
    assert out.shape == (B, 1)
    assert jnp.allclose(out, ref, atol=1e-5, rtol=1e-5), "mismatch vs JAX reference"

    print("KERNEL_OK")
</pallas_src>

<mosaic_0001>
module attributes {stable_mosaic.version = 11 : i64} {
  func.func @qnn_classifier_kernel(%arg0: i32, %arg1: memref<512x8xf32, #tpu.memory_space<vmem>>, %arg2: memref<8x1xf32, #tpu.memory_space<vmem>>, %arg3: memref<2xf32, #tpu.memory_space<smem>>, %arg4: memref<1x512xf32, #tpu.memory_space<vmem>>) attributes {dimension_semantics = [#tpu.dimension_semantics<parallel>], iteration_bounds = array<i64: 1>, scalar_prefetch = 0 : i64, scratch_operands = 0 : i64, tpu.core_type = #tpu.core_type<tc>, window_params = [{transform_indices = @transform_0, window_bounds = array<i64: 512, 8>}, {pipeline_mode = #tpu.pipeline_mode<synchronous>, transform_indices = @transform_1, window_bounds = array<i64: 8, 1>}, {transform_indices = @transform_2, window_bounds = array<i64: 2>}, {transform_indices = @transform_3, window_bounds = array<i64: 1, 512>}]} {
    %c0 = arith.constant 0 : index
    %c0_0 = arith.constant 0 : index
    %0 = vector.load %arg1[%c0, %c0_0] : memref<512x8xf32, #tpu.memory_space<vmem>>, vector<512x8xf32>
    %1 = tpu.transpose %0, [1, 0] : vector<512x8xf32> -> vector<8x512xf32>
    %c0_1 = arith.constant 0 : index
    %c0_2 = arith.constant 0 : index
    %2 = vector.load %arg2[%c0_1, %c0_2] : memref<8x1xf32, #tpu.memory_space<vmem>>, vector<8x1xf32>
    %3 = vector.broadcast %2 : vector<8x1xf32> to vector<8x512xf32>
    %4 = arith.addf %1, %3 : vector<8x512xf32>
    %5 = math.cos %4 : vector<8x512xf32>
    %c4_i32 = arith.constant 4 : i32
    %6 = tpu.dynamic_rotate %5 by %c4_i32 dim 0 : vector<8x512xf32>, i32 -> vector<8x512xf32>
    %7 = arith.mulf %5, %6 : vector<8x512xf32>
    %c2_i32 = arith.constant 2 : i32
    %8 = tpu.dynamic_rotate %7 by %c2_i32 dim 0 : vector<8x512xf32>, i32 -> vector<8x512xf32>
    %9 = arith.mulf %7, %8 : vector<8x512xf32>
    %c1_i32 = arith.constant 1 : i32
    %10 = tpu.dynamic_rotate %9 by %c1_i32 dim 0 : vector<8x512xf32>, i32 -> vector<8x512xf32>
    %11 = arith.mulf %9, %10 : vector<8x512xf32>
    %12 = vector.extract_strided_slice %11 {offsets = [0, 0], sizes = [1, 512], strides = [1, 1]} : vector<8x512xf32> to vector<1x512xf32>
    %c0_3 = arith.constant 0 : index
    %13 = memref.load %arg3[%c0_3] : memref<2xf32, #tpu.memory_space<smem>>
    %14 = vector.broadcast %13 : f32 to vector<1x512xf32>
    %15 = arith.mulf %12, %14 : vector<1x512xf32>
    %c1 = arith.constant 1 : index
    %16 = memref.load %arg3[%c1] : memref<2xf32, #tpu.memory_space<smem>>
    %17 = vector.broadcast %16 : f32 to vector<1x512xf32>
    %18 = arith.addf %15, %17 : vector<1x512xf32>
    %cst = arith.constant 5.000000e-01 : f32
    %19 = vector.broadcast %cst : f32 to vector<1x512xf32>
    %20 = arith.mulf %19, %18 : vector<1x512xf32>
    %21 = math.tanh %20 : vector<1x512xf32>
    %cst_4 = arith.constant 5.000000e-01 : f32
    %22 = vector.broadcast %cst_4 : f32 to vector<1x512xf32>
    %23 = arith.mulf %22, %21 : vector<1x512xf32>
    %cst_5 = arith.constant 5.000000e-01 : f32
    %24 = vector.broadcast %cst_5 : f32 to vector<1x512xf32>
    %25 = arith.addf %24, %23 : vector<1x512xf32>
    %c0_6 = arith.constant 0 : index
    %c0_7 = arith.constant 0 : index
    %26 = vector.load %arg4[%c0_6, %c0_7] : memref<1x512xf32, #tpu.memory_space<vmem>>, vector<1x512xf32>
    tpu.vector_store %arg4[%c0_6, %c0_7], %25 {strides = array<i32>} : memref<1x512xf32, #tpu.memory_space<vmem>>, vector<1x512xf32>,
    return
  }
  func.func @transform_0(%arg0: i32) -> (i32, i32) {
    %c0_i32 = arith.constant 0 : i32
    %c0_i32_0 = arith.constant 0 : i32
    return %arg0, %c0_i32 : i32, i32
  }
  func.func @transform_1(%arg0: i32) -> (i32, i32) {
    %c0_i32 = arith.constant 0 : i32
    %c0_i32_0 = arith.constant 0 : i32
    %c0_i32_1 = arith.constant 0 : i32
    return %c0_i32, %c0_i32_0 : i32, i32
  }
  func.func @transform_2(%arg0: i32) -> i32 {
    %c0_i32 = arith.constant 0 : i32
    %c0_i32_0 = arith.constant 0 : i32
    return %c0_i32 : i32
  }
  func.func @transform_3(%arg0: i32) -> (i32, i32) {
    %c0_i32 = arith.constant 0 : i32
    %c0_i32_0 = arith.constant 0 : i32
    return %c0_i32, %arg0 : i32, i32
  }
}

</mosaic_0001>

<llo_original>
// kernel: tpu_custom_call.1
$region0: #{tpu_custom_call.1}
  #allocation0 [shape = 'u32[]', space=smem, size = 0x4, offset = 0x4, fixed_abs, tag = 'smem constant byte address 0x4 - core index']
  #allocation1 [shape = 'u32[144,128]{1,0:T(1,128)}', space=vmem, size = 0x12000, scoped, tag = 'internal scratch']
  %s0 = inlined_call_operand.vmem [shape: f32[500,8], index: 0, kind: input, shape index: {}]
  %s1 = inlined_call_operand.vmem [shape: f32[8,1], index: 1, kind: input, shape index: {}]
  %s2 = inlined_call_operand.vmem [shape: f32[2], index: 2, kind: input, shape index: {}]
  %s3 = inlined_call_operand.hbm [shape: f32[1,500], index: 3, kind: output, shape index: {}]
  %s4 = sld [smem:[#allocation0]]
  $region26: #{tpu_custom_call.1} parent=0
    _
  %s6 = ssub.s32 1, %s4
  %s7 = scalar_select 0, %s6, %s4
  $region1: #{tpu_custom_call.1} parent=0
    #allocation2 [shape = 'u8[512]{0}', space=smem, size = 0x200, scoped, tag = 'input window, operand 2, single buffered']
    #allocation3 [shape = 's32[1]{0}', space=sflag, size = 0x4, scoped, tag = 'scoped memory for tpu_custom_call.1']
    #allocation4 [shape = 's32[1]{0}', space=sflag, size = 0x4, scoped, tag = 'scoped memory for tpu_custom_call.1']
    #allocation5 [shape = 'u8[2048]{0}', space=vmem, size = 0x800, scoped, tag = 'output window, operand 0, single buffered']
    %8 = vsyncpa [#allocation4], 0
    %9 = vsyncpa [#allocation3], 0
    // Predicated region
    $region2: #{tpu_custom_call.1} parent=1 // pred_check
      _
    $region3: #{tpu_custom_call.1} parent=1 // pred_check_branch
      %11 = sbr.rel (0) target = $region5
    $region4: #{tpu_custom_call.1} parent=1 // pred_region
      _
    $region5: #{tpu_custom_call.1} parent=1 // pred_fallthru
      _
    // Predicated region
    $region6: #{tpu_custom_call.1} parent=1 // pred_check
      _
    $region7: #{tpu_custom_call.1} parent=1 // pred_check_branch
      %13 = sbr.rel (0) target = $region9
    $region8: #{tpu_custom_call.1} parent=1 // pred_region
      _
    $region9: #{tpu_custom_call.1} parent=1 // pred_fallthru
      _
    // Predicated region
    $region10: #{tpu_custom_call.1} parent=1 // pred_check
      _
    $region11: #{tpu_custom_call.1} parent=1 // pred_check_branch
      %15 = sbr.rel (0) target = $region13
    $region12: #{tpu_custom_call.1} parent=1 // pred_region
      %s17 = ssub.s32 16, 16
      %18 = vsyncadd [#allocation4], %s17
      %s20 = sshll.u32 %s2, 4
      %s21 = int_to_ptr.vmem [resolvable:$true] %s20
      %23 = dma.vmem_to_smem %s21, 16, [#allocation2], [#allocation4]
    $region13: #{tpu_custom_call.1} parent=1 // pred_fallthru
      _
    // Predicated region
    $region14: #{tpu_custom_call.1} parent=1 // pred_check
      _
    $region15: #{tpu_custom_call.1} parent=1 // pred_check_branch
      %25 = sbr.rel (0) target = $region17
    $region16: #{tpu_custom_call.1} parent=1 // pred_region
      %26 = dma.done [#allocation4], 16
    $region17: #{tpu_custom_call.1} parent=1 // pred_fallthru
      _
    %27 = sfence
    %v28 = vld [vmem:[%s0] sm:$0xff]
    %v29 = vld [vmem:[%s0 + $0x8] sm:$0xff]
    %v30 = vld [vmem:[%s0 + $0x10] sm:$0xff]
    %v31 = vld [vmem:[%s0 + $0x18] sm:$0xff]
    %v32 = vld [vmem:[%s0 + $0x20] sm:$0xff]
    %v33 = vld [vmem:[%s0 + $0x28] sm:$0xff]
    %v34 = vld [vmem:[%s0 + $0x30] sm:$0xff]
    %v35 = vld [vmem:[%s0 + $0x38] sm:$0xff]
    %v36 = vld [vmem:[%s0 + $0x40] sm:$0xff]
    %v37 = vld [vmem:[%s0 + $0x48] sm:$0xff]
    %v38 = vld [vmem:[%s0 + $0x50] sm:$0xff]
    %v39 = vld [vmem:[%s0 + $0x58] sm:$0xff]
    %v40 = vld [vmem:[%s0 + $0x60] sm:$0xff]
    %v41 = vld [vmem:[%s0 + $0x68] sm:$0xff]
    %v42 = vld [vmem:[%s0 + $0x70] sm:$0xff]
    %v43 = vld [vmem:[%s0 + $0x78] sm:$0xff]
    %v44 = vld [vmem:[%s0 + $0x80] sm:$0xff]
    %v45 = vld [vmem:[%s0 + $0x88] sm:$0xff]
    %v46 = vld [vmem:[%s0 + $0x90] sm:$0xff]
    %v47 = vld [vmem:[%s0 + $0x98] sm:$0xff]
    %v48 = vld [vmem:[%s0 + $0xa0] sm:$0xff]
    %v49 = vld [vmem:[%s0 + $0xa8] sm:$0xff]
    %v50 = vld [vmem:[%s0 + $0xb0] sm:$0xff]
    %v51 = vld [vmem:[%s0 + $0xb8] sm:$0xff]
    %v52 = vld [vmem:[%s0 + $0xc0] sm:$0xff]
    %v53 = vld [vmem:[%s0 + $0xc8] sm:$0xff]
    %v54 = vld [vmem:[%s0 + $0xd0] sm:$0xff]
    %v55 = vld [vmem:[%s0 + $0xd8] sm:$0xff]
    %v56 = vld [vmem:[%s0 + $0xe0] sm:$0xff]
    %v57 = vld [vmem:[%s0 + $0xe8] sm:$0xff]
    %v58 = vld [vmem:[%s0 + $0xf0] sm:$0xff]
    %v59 = vld [vmem:[%s0 + $0xf8] sm:$0xff]
    %v60 = vld [vmem:[%s0 + $0x100] sm:$0xff]
    %v61 = vld [vmem:[%s0 + $0x108] sm:$0xff]
    %v62 = vld [vmem:[%s0 + $0x110] sm:$0xff]
    %v63 = vld [vmem:[%s0 + $0x118] sm:$0xff]
    %v64 = vld [vmem:[%s0 + $0x120] sm:$0xff]
    %v65 = vld [vmem:[%s0 + $0x128] sm:$0xff]
    %v66 = vld [vmem:[%s0 + $0x130] sm:$0xff]
    %v67 = vld [vmem:[%s0 + $0x138] sm:$0xff]
    %v68 = vld [vmem:[%s0 + $0x140] sm:$0xff]
    %v69 = vld [vmem:[%s0 + $0x148] sm:$0xff]
    %v70 = vld [vmem:[%s0 + $0x150] sm:$0xff]
    %v71 = vld [vmem:[%s0 + $0x158] sm:$0xff]
    %v72 = vld [vmem:[%s0 + $0x160] sm:$0xff]
    %v73 = vld [vmem:[%s0 + $0x168] sm:$0xff]
    %v74 = vld [vmem:[%s0 + $0x170] sm:$0xff]
    %v75 = vld [vmem:[%s0 + $0x178] sm:$0xff]
    %v76 = vld [vmem:[%s0 + $0x180] sm:$0xff]
    %v77 = vld [vmem:[%s0 + $0x188] sm:$0xff]
    %v78 = vld [vmem:[%s0 + $0x190] sm:$0xff]
    %v79 = vld [vmem:[%s0 + $0x198] sm:$0xff]
    %v80 = vld [vmem:[%s0 + $0x1a0] sm:$0xff]
    %v81 = vld [vmem:[%s0 + $0x1a8] sm:$0xff]
    %v82 = vld [vmem:[%s0 + $0x1b0] sm:$0xff]
    %v83 = vld [vmem:[%s0 + $0x1b8] sm:$0xff]
    %v84 = vld [vmem:[%s0 + $0x1c0] sm:$0xff]
    %v85 = vld [vmem:[%s0 + $0x1c8] sm:$0xff]
    %v86 = vld [vmem:[%s0 + $0x1d0] sm:$0xff]
    %v87 = vld [vmem:[%s0 + $0x1d8] sm:$0xff]
    %v88 = vld [vmem:[%s0 + $0x1e0] sm:$0xff]
    %v89 = vld [vmem:[%s0 + $0x1e8] sm:$0xff]
    %v90 = vld [vmem:[%s0 + $0x1f0] sm:$0xff]
    %v91 = vld [vmem:[%s0 + $0x1f8] sm:$0xff]
    %92 = vxpose.xlu0.b32.start [1/16] %v28, 128
    %93 = vxpose.xlu0.b32.cont [2/16] %v29, 128
    %94 = vxpose.xlu0.b32.cont [3/16] %v30, 128
    %95 = vxpose.xlu0.b32.cont [4/16] %v31, 128
    %96 = vxpose.xlu0.b32.cont [5/16] %v32, 128
    %97 = vxpose.xlu0.b32.cont [6/16] %v33, 128
    %98 = vxpose.xlu0.b32.cont [7/16] %v34, 128
    %99 = vxpose.xlu0.b32.cont [8/16] %v35, 128
    %100 = vxpose.xlu0.b32.cont [9/16] %v36, 128
    %101 = vxpose.xlu0.b32.cont [10/16] %v37, 128
    %102 = vxpose.xlu0.b32.cont [11/16] %v38, 128
    %103 = vxpose.xlu0.b32.cont [12/16] %v39, 128
    %104 = vxpose.xlu0.b32.cont [13/16] %v40, 128
    %105 = vxpose.xlu0.b32.cont [14/16] %v41, 128
    %106 = vxpose.xlu0.b32.cont [15/16] %v42, 128
    %107 = vxpose.xlu0.b32.end [16/16] %v43, 128
    %v108 = vpop.trf.xlu0
    %v109 = vpop.trf.xlu0
    %v110 = vpop.trf.xlu0
    %v111 = vpop.trf.xlu0
    %v112 = vpop.trf.xlu0
    %v113 = vpop.trf.xlu0
    %v114 = vpop.trf.xlu0
    %v115 = vpop.trf.xlu0
    %v116 = vpop.trf.xlu0
    %v117 = vpop.trf.xlu0
    %v118 = vpop.trf.xlu0
    %v119 = vpop.trf.xlu0
    %v120 = vpop.trf.xlu0
    %v121 = vpop.trf.xlu0
    %v122 = vpop.trf.xlu0
    %v123 = vpop.trf.xlu0
    %124 = vxpose.xlu0.b32.start [1/16] %v44, 128
    %125 = vxpose.xlu0.b32.cont [2/16] %v45, 128
    %126 = vxpose.xlu0.b32.cont [3/16] %v46, 128
    %127 = vxpose.xlu0.b32.cont [4/16] %v47, 128
    %128 = vxpose.xlu0.b32.cont [5/16] %v48, 128
    %129 = vxpose.xlu0.b32.cont [6/16] %v49, 128
    %130 = vxpose.xlu0.b32.cont [7/16] %v50, 128
    %131 = vxpose.xlu0.b32.cont [8/16] %v51, 128
    %132 = vxpose.xlu0.b32.cont [9/16] %v52, 128
    %133 = vxpose.xlu0.b32.cont [10/16] %v53, 128
    %134 = vxpose.xlu0.b32.cont [11/16] %v54, 128
    %135 = vxpose.xlu0.b32.cont [12/16] %v55, 128
    %136 = vxpose.xlu0.b32.cont [13/16] %v56, 128
    %137 = vxpose.xlu0.b32.cont [14/16] %v57, 128
    %138 = vxpose.xlu0.b32.cont [15/16] %v58, 128
    %139 = vxpose.xlu0.b32.end [16/16] %v59, 128
    %v140 = vpop.trf.xlu0
    %v141 = vpop.trf.xlu0
    %v142 = vpop.trf.xlu0
    %v143 = vpop.trf.xlu0
    %v144 = vpop.trf.xlu0
    %v145 = vpop.trf.xlu0
    %v146 = vpop.trf.xlu0
    %v147 = vpop.trf.xlu0
    %v148 = vpop.trf.xlu0
    %v149 = vpop.trf.xlu0
    %v150 = vpop.trf.xlu0
    %v151 = vpop.trf.xlu0
    %v152 = vpop.trf.xlu0
    %v153 = vpop.trf.xlu0
    %v154 = vpop.trf.xlu0
    %v155 = vpop.trf.xlu0
    %156 = vxpose.xlu0.b32.start [1/16] %v60, 128
    %157 = vxpose.xlu0.b32.cont [2/16] %v61, 128
    %158 = vxpose.xlu0.b32.cont [3/16] %v62, 128
    %159 = vxpose.xlu0.b32.cont [4/16] %v63, 128
    %160 = vxpose.xlu0.b32.cont [5/16] %v64, 128
    %161 = vxpose.xlu0.b32.cont [6/16] %v65, 128
    %162 = vxpose.xlu0.b32.cont [7/16] %v66, 128
    %163 = vxpose.xlu0.b32.cont [8/16] %v67, 128
    %164 = vxpose.xlu0.b32.cont [9/16] %v68, 128
    %165 = vxpose.xlu0.b32.cont [10/16] %v69, 128
    %166 = vxpose.xlu0.b32.cont [11/16] %v70, 128
    %167 = vxpose.xlu0.b32.cont [12/16] %v71, 128
    %168 = vxpose.xlu0.b32.cont [13/16] %v72, 128
    %169 = vxpose.xlu0.b32.cont [14/16] %v73, 128
    %170 = vxpose.xlu0.b32.cont [15/16] %v74, 128
    %171 = vxpose.xlu0.b32.end [16/16] %v75, 128
    %v172 = vpop.trf.xlu0
    %v173 = vpop.trf.xlu0
    %v174 = vpop.trf.xlu0
    %v175 = vpop.trf.xlu0
    %v176 = vpop.trf.xlu0
    %v177 = vpop.trf.xlu0
    %v178 = vpop.trf.xlu0
    %v179 = vpop.trf.xlu0
    %v180 = vpop.trf.xlu0
    %v181 = vpop.trf.xlu0
    %v182 = vpop.trf.xlu0
    %v183 = vpop.trf.xlu0
    %v184 = vpop.trf.xlu0
    %v185 = vpop.trf.xlu0
    %v186 = vpop.trf.xlu0
    %v187 = vpop.trf.xlu0
    %188 = vxpose.xlu0.b32.start [1/16] %v76, 128
    %189 = vxpose.xlu0.b32.cont [2/16] %v77, 128
    %190 = vxpose.xlu0.b32.cont [3/16] %v78, 128
    %191 = vxpose.xlu0.b32.cont [4/16] %v79, 128
    %192 = vxpose.xlu0.b32.cont [5/16] %v80, 128
    %193 = vxpose.xlu0.b32.cont [6/16] %v81, 128
    %194 = vxpose.xlu0.b32.cont [7/16] %v82, 128
    %195 = vxpose.xlu0.b32.cont [8/16] %v83, 128
    %196 = vxpose.xlu0.b32.cont [9/16] %v84, 128
    %197 = vxpose.xlu0.b32.cont [10/16] %v85, 128
    %198 = vxpose.xlu0.b32.cont [11/16] %v86, 128
    %199 = vxpose.xlu0.b32.cont [12/16] %v87, 128
    %200 = vxpose.xlu0.b32.cont [13/16] %v88, 128
    %201 = vxpose.xlu0.b32.cont [14/16] %v89, 128
    %202 = vxpose.xlu0.b32.cont [15/16] %v90, 128
    %203 = vxpose.xlu0.b32.end [16/16] %v91, 128
    %v204 = vpop.trf.xlu0
    %v205 = vpop.trf.xlu0
    %v206 = vpop.trf.xlu0
    %v207 = vpop.trf.xlu0
    %v208 = vpop.trf.xlu0
    %v209 = vpop.trf.xlu0
    %v210 = vpop.trf.xlu0
    %v211 = vpop.trf.xlu0
    %v212 = vpop.trf.xlu0
    %v213 = vpop.trf.xlu0
    %v214 = vpop.trf.xlu0
    %v215 = vpop.trf.xlu0
    %v216 = vpop.trf.xlu0
    %v217 = vpop.trf.xlu0
    %v218 = vpop.trf.xlu0
    %v219 = vpop.trf.xlu0
    %v220 = vld [vmem:[%s1] sm:$0xff]
    %222 = vset.pattern.permute.xlu0 0
    %223 = vperm.xlu0 %222, %v220
    %v224 = vpop.permute.xlu0 %223
    %v226 = vadd.f32 %v108, %v224
    %v227 = vadd.f32 %v140, %v224
    %v228 = vadd.f32 %v172, %v224
    %v229 = vadd.f32 %v204, %v224
    %v230 = vand.u32 2147483647, %v226
    %vm231 = vcmp.le.f32.partialorder %v230, 0.7853982
    %vm232 = vcmp.lt.s32.totalorder %v226, 0
    %v233 = vand.u32 %v226, 2139095040
    %v234 = vshrl.u32 %v233, 23
    %v235 = vsub.s32 %v234, 127
    %v236 = vand.u32 2147483647, %v226
    %v237 = vand.u32 %v236, 8388607
    %v238 = vor.u32 %v237, 8388608
    %v239 = vsub.s32 0, %v238
    %v240 = vadd.s32 %v235, 1
    %vm241 = vcmp.gt.s32.totalorder %v240, 0
    %v242 = vsel %vm241, %v240, 0
    %v243 = vshrl.u32 %v242, 5
    %v244 = vand.u32 %v242, 31
    %v245 = vsub.s32 32, %v244
    %v246 = vshrl.u32 683565275, %v245
    %v247 = vshll.u32 683565275, %v244
    %v248 = vshrl.u32 2475754826, %v245
    %v249 = vor.u32 %v247, %v248
    %v250 = vshll.u32 2475754826, %v244
    %v251 = vshrl.u32 2131351028, %v245
    %v252 = vor.u32 %v250, %v251
    %v253 = vshll.u32 2131351028, %v244
    %v254 = vshrl.u32 2102212464, %v245
    %v255 = vor.u32 %v253, %v254
    %v256 = vshll.u32 2102212464, %v244
    %v257 = vshrl.u32 920167782, %v245
    %v258 = vor.u32 %v256, %v257
    %v259 = vshll.u32 920167782, %v244
    %v260 = vshrl.u32 1326507024, %v245
    %v261 = vor.u32 %v259, %v260
    %vm262 = vcmp.lt.s32.totalorder %v243, 1
    %vm263 = vcmp.lt.s32.totalorder %v243, 2
    %vm264 = vcmp.lt.s32.totalorder %v243, 3
    %vm265 = vcmp.lt.s32.totalorder %v243, 4
    %v266 = vsel %vm262, %v246, %v249
    %v267 = vsel %vm265, %v255, 2102212464
    %v268 = vsel %vm264, %v252, %v267
    %v269 = vsel %vm263, %v266, %v268
    %v270 = vsel %vm262, %v249, %v252
    %v271 = vsel %vm265, %v258, 920167782
    %v272 = vsel %vm264, %v255, %v271
    %v273 = vsel %vm263, %v270, %v272
    %v274 = vsel %vm262, %v252, %v255
    %v275 = vsel %vm265, %v261, 1326507024
    %v276 = vsel %vm264, %v258, %v275
    %v277 = vsel %vm263, %v274, %v276
    %v278 = vshll.u32 %v238, 8
    %v279 = vmul.u32.u64.compose %v278, %v277
    %v280 = vextract.low.u32 %v279
    %v281 = vextract.high.u32 %v279
    %v282 = vmul.u32.u64.compose %v278, %v273
    %v283 = vextract.low.u32 %v282
    %v284 = vextract.high.u32 %v282
    %v285 = vmul.u32 %v278, %v269
    %v286 = vadd.s32 %v281, %v283
    %vm287 = vc.u32 %v281, %v283
    %v288 = vadd.s32 %v284, 1
    %v289 = vsel %vm287, %v288, %v284
    %v290 = vadd.s32 %v285, %v289
    %v291 = vadd.s32 %v290, 536870912
    %v292 = vshrl.u32 %v291, 30
    %v293 = vshll.u32 %v292, 30
    %v294 = vsub.s32 %v290, %v293
    %vm295 = vcmp.lt.s32.totalorder %v294, 0
    %v296 = vsub.s32 0, %v294
    %v297 = vsel %vm295, %v296, %v294
    %v298 = vclz %v297
    %v299 = vsub.s32 %v298, 2
    %vm300 = vcmp.gt.s32.totalorder 0, %v299
    %v301 = vsel %vm300, 0, %v299
    %v302 = vsub.s32 32, %v301
    %v303 = vshll.u32 %v294, %v301
    %v304 = vshrl.u32 %v286, %v302
    %v305 = vor.u32 %v303, %v304
    %v306 = vsub.s32 4294967266, %v301
    %v307 = vadd.s32 %v306, 127
    %v308 = vshll.u32 %v307, 23
    %v309 = vor.u32 4788187, %v308
    %v310 = vand.u32 2147483647, %v309
    %v312 = vcvt.s32.f32 %v305
    %v313 = vmul.f32 %v312, %v310
    %v314 = vxor.u32 %v313, 2147483648
    %v315 = vsel %vm232, %v314, %v313
    %v316 = vsub.s32 4, %v292
    %v317 = vsel %vm232, %v316, %v292
    %v318 = vsel %vm231, %v226, %v315
    %v319 = vsel %vm231, 0, %v317
    %v320 = vcosq.f32.pop %v318
    %v321 = vsinq.f32.pop %v318
    %vm322 = vweird.f32 %v226
    %v323 = vand.u32 %v319, 3
    %vm324 = vcmp.lt.s32.totalorder %v323, 2
    %vm325 = vcmp.eq.s32.totalorder %v323, 0
    %v326 = vxor.u32 %v321, 2147483648
    %v327 = vsel %vm325, %v320, %v326
    %vm328 = vcmp.eq.s32.totalorder %v323, 2
    %v329 = vxor.u32 %v320, 2147483648
    %v330 = vsel %vm328, %v329, %v321
    %v331 = vsel %vm324, %v327, %v330
    %v332 = vsel %vm322, nan, %v331
    %v333 = vand.u32 2147483647, %v227
    %vm334 = vcmp.le.f32.partialorder %v333, 0.7853982
    %vm335 = vcmp.lt.s32.totalorder %v227, 0
    %v336 = vand.u32 %v227, 2139095040
    %v337 = vshrl.u32 %v336, 23
    %v338 = vsub.s32 %v337, 127
    %v339 = vand.u32 2147483647, %v227
    %v340 = vand.u32 %v339, 8388607
    %v341 = vor.u32 %v340, 8388608
    %v342 = vsub.s32 0, %v341
    %v343 = vadd.s32 %v338, 1
    %vm344 = vcmp.gt.s32.totalorder %v343, 0
    %v345 = vsel %vm344, %v343, 0
    %v346 = vshrl.u32 %v345, 5
    %v347 = vand.u32 %v345, 31
    %v348 = vsub.s32 32, %v347
    %v349 = vshrl.u32 683565275, %v348
    %v350 = vshll.u32 683565275, %v347
    %v351 = vshrl.u32 2475754826, %v348
    %v352 = vor.u32 %v350, %v351
    %v353 = vshll.u32 2475754826, %v347
    %v354 = vshrl.u32 2131351028, %v348
    %v355 = vor.u32 %v353, %v354
    %v356 = vshll.u32 2131351028, %v347
    %v357 = vshrl.u32 2102212464, %v348
    %v358 = vor.u32 %v356, %v357
    %v359 = vshll.u32 2102212464, %v347
    %v360 = vshrl.u32 920167782, %v348
    %v361 = vor.u32 %v359, %v360
    %v362 = vshll.u32 920167782, %v347
    %v363 = vshrl.u32 1326507024, %v348
    %v364 = vor.u32 %v362, %v363
    %vm365 = vcmp.lt.s32.totalorder %v346, 1
    %vm366 = vcmp.lt.s32.totalorder %v346, 2
    %vm367 = vcmp.lt.s32.totalorder %v346, 3
    %vm368 = vcmp.lt.s32.totalorder %v346, 4
    %v369 = vsel %vm365, %v349, %v352
    %v370 = vsel %vm368, %v358, 2102212464
    %v371 = vsel %vm367, %v355, %v370
    %v372 = vsel %vm366, %v369, %v371
    %v373 = vsel %vm365, %v352, %v355
    %v374 = vsel %vm368, %v361, 920167782
    %v375 = vsel %vm367, %v358, %v374
    %v376 = vsel %vm366, %v373, %v375
    %v377 = vsel %vm365, %v355, %v358
    %v378 = vsel %vm368, %v364, 1326507024
    %v379 = vsel %vm367, %v361, %v378
    %v380 = vsel %vm366, %v377, %v379
    %v381 = vshll.u32 %v341, 8
    %v382 = vmul.u32.u64.compose %v381, %v380
    %v383 = vextract.low.u32 %v382
    %v384 = vextract.high.u32 %v382
    %v385 = vmul.u32.u64.compose %v381, %v376
    %v386 = vextract.low.u32 %v385
    %v387 = vextract.high.u32 %v385
    %v388 = vmul.u32 %v381, %v372
    %v389 = vadd.s32 %v384, %v386
    %vm390 = vc.u32 %v384, %v386
    %v391 = vadd.s32 %v387, 1
    %v392 = vsel %vm390, %v391, %v387
    %v393 = vadd.s32 %v388, %v392
    %v394 = vadd.s32 %v393, 536870912
    %v395 = vshrl.u32 %v394, 30
    %v396 = vshll.u32 %v395, 30
    %v397 = vsub.s32 %v393, %v396
    %vm398 = vcmp.lt.s32.totalorder %v397, 0
    %v399 = vsub.s32 0, %v397
    %v400 = vsel %vm398, %v399, %v397
    %v401 = vclz %v400
    %v402 = vsub.s32 %v401, 2
    %vm403 = vcmp.gt.s32.totalorder 0, %v402
    %v404 = vsel %vm403, 0, %v402
    %v405 = vsub.s32 32, %v404
    %v406 = vshll.u32 %v397, %v404
    %v407 = vshrl.u32 %v389, %v405
    %v408 = vor.u32 %v406, %v407
    %v409 = vsub.s32 4294967266, %v404
    %v410 = vadd.s32 %v409, 127
    %v411 = vshll.u32 %v410, 23
    %v412 = vor.u32 4788187, %v411
    %v413 = vand.u32 2147483647, %v412
    %v415 = vcvt.s32.f32 %v408
    %v416 = vmul.f32 %v415, %v413
    %v417 = vxor.u32 %v416, 2147483648
    %v418 = vsel %vm335, %v417, %v416
    %v419 = vsub.s32 4, %v395
    %v420 = vsel %vm335, %v419, %v395
    %v421 = vsel %vm334, %v227, %v418
    %v422 = vsel %vm334, 0, %v420
    %v423 = vcosq.f32.pop %v421
    %v424 = vsinq.f32.pop %v421
    %vm425 = vweird.f32 %v227
    %v426 = vand.u32 %v422, 3
    %vm427 = vcmp.lt.s32.totalorder %v426, 2
    %vm428 = vcmp.eq.s32.totalorder %v426, 0
    %v429 = vxor.u32 %v424, 2147483648
    %v430 = vsel %vm428, %v423, %v429
    %vm431 = vcmp.eq.s32.totalorder %v426, 2
    %v432 = vxor.u32 %v423, 2147483648
    %v433 = vsel %vm431, %v432, %v424
    %v434 = vsel %vm427, %v430, %v433
    %v435 = vsel %vm425, nan, %v434
    %v436 = vand.u32 2147483647, %v228
    %vm437 = vcmp.le.f32.partialorder %v436, 0.7853982
    %vm438 = vcmp.lt.s32.totalorder %v228, 0
    %v439 = vand.u32 %v228, 2139095040
    %v440 = vshrl.u32 %v439, 23
    %v441 = vsub.s32 %v440, 127
    %v442 = vand.u32 2147483647, %v228
    %v443 = vand.u32 %v442, 8388607
    %v444 = vor.u32 %v443, 8388608
    %v445 = vsub.s32 0, %v444
    %v446 = vadd.s32 %v441, 1
    %vm447 = vcmp.gt.s32.totalorder %v446, 0
    %v448 = vsel %vm447, %v446, 0
    %v449 = vshrl.u32 %v448, 5
    %v450 = vand.u32 %v448, 31
    %v451 = vsub.s32 32, %v450
    %v452 = vshrl.u32 683565275, %v451
    %v453 = vshll.u32 683565275, %v450
    %v454 = vshrl.u32 2475754826, %v451
    %v455 = vor.u32 %v453, %v454
    %v456 = vshll.u32 2475754826, %v450
    %v457 = vshrl.u32 2131351028, %v451
    %v458 = vor.u32 %v456, %v457
    %v459 = vshll.u32 2131351028, %v450
    %v460 = vshrl.u32 2102212464, %v451
    %v461 = vor.u32 %v459, %v460
    %v462 = vshll.u32 2102212464, %v450
    %v463 = vshrl.u32 920167782, %v451
    %v464 = vor.u32 %v462, %v463
    %v465 = vshll.u32 920167782, %v450
    %v466 = vshrl.u32 1326507024, %v451
    %v467 = vor.u32 %v465, %v466
    %vm468 = vcmp.lt.s32.totalorder %v449, 1
    %vm469 = vcmp.lt.s32.totalorder %v449, 2
    %vm470 = vcmp.lt.s32.totalorder %v449, 3
    %vm471 = vcmp.lt.s32.totalorder %v449, 4
    %v472 = vsel %vm468, %v452, %v455
    %v473 = vsel %vm471, %v461, 2102212464
    %v474 = vsel %vm470, %v458, %v473
    %v475 = vsel %vm469, %v472, %v474
    %v476 = vsel %vm468, %v455, %v458
    %v477 = vsel %vm471, %v464, 920167782
    %v478 = vsel %vm470, %v461, %v477
    %v479 = vsel %vm469, %v476, %v478
    %v480 = vsel %vm468, %v458, %v461
    %v481 = vsel %vm471, %v467, 1326507024
    %v482 = vsel %vm470, %v464, %v481
    %v483 = vsel %vm469, %v480, %v482
    %v484 = vshll.u32 %v444, 8
    %v485 = vmul.u32.u64.compose %v484, %v483
    %v486 = vextract.low.u32 %v485
    %v487 = vextract.high.u32 %v485
    %v488 = vmul.u32.u64.compose %v484, %v479
    %v489 = vextract.low.u32 %v488
    %v490 = vextract.high.u32 %v488
    %v491 = vmul.u32 %v484, %v475
    %v492 = vadd.s32 %v487, %v489
    %vm493 = vc.u32 %v487, %v489
    %v494 = vadd.s32 %v490, 1
    %v495 = vsel %vm493, %v494, %v490
    %v496 = vadd.s32 %v491, %v495
    %v497 = vadd.s32 %v496, 536870912
    %v498 = vshrl.u32 %v497, 30
    %v499 = vshll.u32 %v498, 30
    %v500 = vsub.s32 %v496, %v499
    %vm501 = vcmp.lt.s32.totalorder %v500, 0
    %v502 = vsub.s32 0, %v500
    %v503 = vsel %vm501, %v502, %v500
    %v504 = vclz %v503
    %v505 = vsub.s32 %v504, 2
    %vm506 = vcmp.gt.s32.totalorder 0, %v505
    %v507 = vsel %vm506, 0, %v505
    %v508 = vsub.s32 32, %v507
    %v509 = vshll.u32 %v500, %v507
    %v510 = vshrl.u32 %v492, %v508
    %v511 = vor.u32 %v509, %v510
    %v512 = vsub.s32 4294967266, %v507
    %v513 = vadd.s32 %v512, 127
    %v514 = vshll.u32 %v513, 23
    %v515 = vor.u32 4788187, %v514
    %v516 = vand.u32 2147483647, %v515
    %v518 = vcvt.s32.f32 %v511
    %v519 = vmul.f32 %v518, %v516
    %v520 = vxor.u32 %v519, 2147483648
    %v521 = vsel %vm438, %v520, %v519
    %v522 = vsub.s32 4, %v498
    %v523 = vsel %vm438, %v522, %v498
    %v524 = vsel %vm437, %v228, %v521
    %v525 = vsel %vm437, 0, %v523
    %v526 = vcosq.f32.pop %v524
    %v527 = vsinq.f32.pop %v524
    %vm528 = vweird.f32 %v228
    %v529 = vand.u32 %v525, 3
    %vm530 = vcmp.lt.s32.totalorder %v529, 2
    %vm531 = vcmp.eq.s32.totalorder %v529, 0
    %v532 = vxor.u32 %v527, 2147483648
    %v533 = vsel %vm531, %v526, %v532
    %vm534 = vcmp.eq.s32.totalorder %v529, 2
    %v535 = vxor.u32 %v526, 2147483648
    %v536 = vsel %vm534, %v535, %v527
    %v537 = vsel %vm530, %v533, %v536
    %v538 = vsel %vm528, nan, %v537
    %v539 = vand.u32 2147483647, %v229
    %vm540 = vcmp.le.f32.partialorder %v539, 0.7853982
    %vm541 = vcmp.lt.s32.totalorder %v229, 0
    %v542 = vand.u32 %v229, 2139095040
    %v543 = vshrl.u32 %v542, 23
    %v544 = vsub.s32 %v543, 127
    %v545 = vand.u32 2147483647, %v229
    %v546 = vand.u32 %v545, 8388607
    %v547 = vor.u32 %v546, 8388608
    %v548 = vsub.s32 0, %v547
    %v549 = vadd.s32 %v544, 1
    %vm550 = vcmp.gt.s32.totalorder %v549, 0
    %v551 = vsel %vm550, %v549, 0
    %v552 = vshrl.u32 %v551, 5
    %v553 = vand.u32 %v551, 31
    %v554 = vsub.s32 32, %v553
    %v555 = vshrl.u32 683565275, %v554
    %v556 = vshll.u32 683565275, %v553
    %v557 = vshrl.u32 2475754826, %v554
    %v558 = vor.u32 %v556, %v557
    %v559 = vshll.u32 2475754826, %v553
    %v560 = vshrl.u32 2131351028, %v554
    %v561 = vor.u32 %v559, %v560
    %v562 = vshll.u32 2131351028, %v553
    %v563 = vshrl.u32 2102212464, %v554
    %v564 = vor.u32 %v562, %v563
    %v565 = vshll.u32 2102212464, %v553
    %v566 = vshrl.u32 920167782, %v554
    %v567 = vor.u32 %v565, %v566
    %v568 = vshll.u32 920167782, %v553
    %v569 = vshrl.u32 1326507024, %v554
    %v570 = vor.u32 %v568, %v569
    %vm571 = vcmp.lt.s32.totalorder %v552, 1
    %vm572 = vcmp.lt.s32.totalorder %v552, 2
    %vm573 = vcmp.lt.s32.totalorder %v552, 3
    %vm574 = vcmp.lt.s32.totalorder %v552, 4
    %v575 = vsel %vm571, %v555, %v558
    %v576 = vsel %vm574, %v564, 2102212464
    %v577 = vsel %vm573, %v561, %v576
    %v578 = vsel %vm572, %v575, %v577
    %v579 = vsel %vm571, %v558, %v561
    %v580 = vsel %vm574, %v567, 920167782
    %v581 = vsel %vm573, %v564, %v580
    %v582 = vsel %vm572, %v579, %v581
    %v583 = vsel %vm571, %v561, %v564
    %v584 = vsel %vm574, %v570, 1326507024
    %v585 = vsel %vm573, %v567, %v584
    %v586 = vsel %vm572, %v583, %v585
    %v587 = vshll.u32 %v547, 8
    %v588 = vmul.u32.u64.compose %v587, %v586
    %v589 = vextract.low.u32 %v588
    %v590 = vextract.high.u32 %v588
    %v591 = vmul.u32.u64.compose %v587, %v582
    %v592 = vextract.low.u32 %v591
    %v593 = vextract.high.u32 %v591
    %v594 = vmul.u32 %v587, %v578
    %v595 = vadd.s32 %v590, %v592
    %vm596 = vc.u32 %v590, %v592
    %v597 = vadd.s32 %v593, 1
    %v598 = vsel %vm596, %v597, %v593
    %v599 = vadd.s32 %v594, %v598
    %v600 = vadd.s32 %v599, 536870912
    %v601 = vshrl.u32 %v600, 30
    %v602 = vshll.u32 %v601, 30
    %v603 = vsub.s32 %v599, %v602
    %vm604 = vcmp.lt.s32.totalorder %v603, 0
    %v605 = vsub.s32 0, %v603
    %v606 = vsel %vm604, %v605, %v603
    %v607 = vclz %v606
    %v608 = vsub.s32 %v607, 2
    %vm609 = vcmp.gt.s32.totalorder 0, %v608
    %v610 = vsel %vm609, 0, %v608
    %v611 = vsub.s32 32, %v610
    %v612 = vshll.u32 %v603, %v610
    %v613 = vshrl.u32 %v595, %v611
    %v614 = vor.u32 %v612, %v613
    %v615 = vsub.s32 4294967266, %v610
    %v616 = vadd.s32 %v615, 127
    %v617 = vshll.u32 %v616, 23
    %v618 = vor.u32 4788187, %v617
    %v619 = vand.u32 2147483647, %v618
    %v621 = vcvt.s32.f32 %v614
    %v622 = vmul.f32 %v621, %v619
    %v623 = vxor.u32 %v622, 2147483648
    %v624 = vsel %vm541, %v623, %v622
    %v625 = vsub.s32 4, %v601
    %v626 = vsel %vm541, %v625, %v601
    %v627 = vsel %vm540, %v229, %v624
    %v628 = vsel %vm540, 0, %v626
    %v629 = vcosq.f32.pop %v627
    %v630 = vsinq.f32.pop %v627
    %vm631 = vweird.f32 %v229
    %v632 = vand.u32 %v628, 3
    %vm633 = vcmp.lt.s32.totalorder %v632, 2
    %vm634 = vcmp.eq.s32.totalorder %v632, 0
    %v635 = vxor.u32 %v630, 2147483648
    %v636 = vsel %vm634, %v629, %v635
    %vm637 = vcmp.eq.s32.totalorder %v632, 2
    %v638 = vxor.u32 %v629, 2147483648
    %v639 = vsel %vm637, %v638, %v630
    %v640 = vsel %vm633, %v636, %v639
    %v641 = vsel %vm631, nan, %v640
    %v642 = vrot.slane %v332, 4
    %v643 = vrot.slane %v435, 4
    %v644 = vrot.slane %v538, 4
    %v645 = vrot.slane %v641, 4
    %v646 = vmul.f32 %v332, %v642
    %v647 = vmul.f32 %v435, %v643
    %v648 = vmul.f32 %v538, %v644
    %v649 = vmul.f32 %v641, %v645
    %v650 = vrot.slane %v646, 6
    %v651 = vrot.slane %v647, 6
    %v652 = vrot.slane %v648, 6
    %v653 = vrot.slane %v649, 6
    %v654 = vmul.f32 %v646, %v650
    %v655 = vmul.f32 %v647, %v651
    %v656 = vmul.f32 %v648, %v652
    %v657 = vmul.f32 %v649, %v653
    %v658 = vrot.slane %v654, 7
    %v659 = vrot.slane %v655, 7
    %v660 = vrot.slane %v656, 7
    %v661 = vrot.slane %v657, 7
    %v662 = vmul.f32 %v654, %v658
    %v663 = vmul.f32 %v655, %v659
    %v664 = vmul.f32 %v656, %v660
    %v665 = vmul.f32 %v657, %v661
    %s666 = sld [smem:[#allocation2]]
    %v667 = vstv %s666
    %v668 = vmul.f32 %v662, %v667
    %v669 = vmul.f32 %v663, %v667
    %v670 = vmul.f32 %v664, %v667
    %v671 = vmul.f32 %v665, %v667
    %s672 = sld [smem:[#allocation2 + $0x1]]
    %v673 = vstv %s672
    %v674 = vadd.f32 %v668, %v673
    %v675 = vadd.f32 %v669, %v673
    %v676 = vadd.f32 %v670, %v673
    %v677 = vadd.f32 %v671, %v673
    %v678 = vmul.f32 %v674, 0.5
    %v679 = vmul.f32 %v675, 0.5
    %v680 = vmul.f32 %v676, 0.5
    %v681 = vmul.f32 %v677, 0.5
    %v682 = vtanh.pop %v678
    %v683 = vtanh.pop %v679
    %v684 = vtanh.pop %v680
    %v685 = vtanh.pop %v681
    %v686 = vmul.f32 %v682, 0.5
    %v687 = vmul.f32 %v683, 0.5
    %v688 = vmul.f32 %v684, 0.5
    %v689 = vmul.f32 %v685, 0.5
    %v690 = vadd.f32 %v686, 0.5
    %v691 = vadd.f32 %v687, 0.5
    %v692 = vadd.f32 %v688, 0.5
    %v693 = vadd.f32 %v689, 0.5
    %v698 = vcombine.low %v690, %v691
    %v699 = vcombine.low %v692, %v693
    %v701 = vunpack.c.l.s4 1966171168
    %v702 = vunpack.c.0.s8 %v701
    %v703 = vlaneseq
    %v704 = vshrl.u32 %v703, 7
    %v705 = vsub.s32 %v702, %v704
    %v706 = vrot.slane %v698, %v705
    %v708 = vunpack.c.l.s4 1966171168
    %v709 = vunpack.c.0.s8 %v708
    %v710 = vlaneseq
    %v711 = vshrl.u32 %v710, 7
    %v712 = vsub.s32 %v709, %v711
    %v713 = vrot.slane %v699, %v712
    %v714 = vcombine.low %v706, %v713
    %v716 = vunpack.c.l.s4 1966171168
    %v717 = vunpack.c.0.s8 %v716
    %v718 = vlaneseq
    %v719 = vshrl.u32 %v718, 7
    %v720 = vsub.s32 %v717, %v719
    %v721 = vrot.slane %v714, %v720
    %v723 = vlaneseq
    %vm724 = vcmp.ge.s32.totalorder %v723, 0
    %vm725 = vcmp.lt.s32.totalorder %v723, 512
    %vm726 = vmand %vm724, %vm725
    %727 = vst.msk [vmem:[#allocation5] sm:$0xf] %vm726, %v721
    // Predicated region
    $region18: #{tpu_custom_call.1} parent=1 // pred_check
      _
    $region19: #{tpu_custom_call.1} parent=1 // pred_check_branch
      %729 = sbr.rel (0) target = $region21
    $region20: #{tpu_custom_call.1} parent=1 // pred_region
      %s731 = ssub.s32 64, 64
      %732 = vsyncadd [#allocation3], %s731
      %s734 = sshll.u32 [#allocation5], 4
      %s735 = int_to_ptr.vmem [resolvable:$true] %s734
      %737 = dma.vmem_to_hbm [thread:$0]  %s735, 64, %s3, [#allocation3]
    $region21: #{tpu_custom_call.1} parent=1 // pred_fallthru
      _
    // Predicated region
    $region22: #{tpu_custom_call.1} parent=1 // pred_check
      _
    $region23: #{tpu_custom_call.1} parent=1 // pred_check_branch
      %739 = sbr.rel (0) target = $region25
    $region24: #{tpu_custom_call.1} parent=1 // pred_region
      %740 = dma.done [#allocation3], 64
    $region25: #{tpu_custom_call.1} parent=1 // pred_fallthru
      _
    %741 = vsyncpa [#allocation3], 1
    %742 = vsyncpa [#allocation4], 1

</llo_original>
